<compile_context>
chip_gen: v5e
topology: v5e:2x2
jax: 0.10.0
libtpu: 0.0.40
codegen_flags: <defaults>
</compile_context>

<pallas_src>
import functools
import math

import jax
import jax.numpy as jnp
from jax.experimental import pallas as pl
from jax.experimental.pallas import tpu as pltpu


def _label_smoothing_kernel(x_ref, tgt_ref, out_ref, *, padding_idx, fill,
                            confidence, n_rows, n_cols, tile_n, tile_v,
                            mask_rows, mask_cols):
    j = pl.program_id(1)                       # vocab (reduction) axis, innermost

    @pl.when(j == 0)
    def _():
        out_ref[...] = jnp.zeros_like(out_ref)

    x = x_ref[...].astype(jnp.float32)         # (tile_n, tile_v)
    tgt = tgt_ref[...]                         # (tile_n, 1) int32

    col = j * tile_v + jax.lax.broadcasted_iota(jnp.int32, (1, tile_v), 1)

    # Rows whose target is the padding index contribute zero (index_fill_);
    # the ragged last row tile is masked only when statically needed.
    row_ok = tgt != padding_idx                # (tile_n, 1)
    if mask_rows:
        i = pl.program_id(0)
        row = i * tile_n + jax.lax.broadcasted_iota(jnp.int32, (tile_n, 1), 0)
        row_ok = row_ok & (row < n_rows)

    keep = row_ok & (col != padding_idx)       # pad column is zero in true_dist
    if mask_cols:
        keep = keep & (col < n_cols)           # ragged last vocab tile

    # Fused cross term sum_j y_j * x_j: y = confidence at the target column,
    # fill elsewhere (pad column / invalid rows handled by `keep`).
    w = jnp.where(col == tgt, jnp.float32(confidence), jnp.float32(fill))
    contrib = jnp.where(keep, w * x, 0.0)      # where() guards NaN/Inf garbage

    # Accumulate into this row tile's resident lane-dense (1, 8, 128) block
    # (every element holds the same partial; the wrapper reads [i, 0, 0]).
    out_ref[...] += jnp.sum(contrib)


def _vmem_capacity_bytes():
    try:
        cap = getattr(pltpu.get_tpu_info(), "vmem_capacity_bytes", None)
        if cap:
            return int(cap)
    except Exception:
        pass
    return 64 * 1024 * 1024                    # conservative (v7x per-TC)


def _round_down(a, m):
    return (a // m) * m


def _round_up(a, m):
    return ((a + m - 1) // m) * m


def _choose_tiles(n, v, itemsize, block_budget, tile_n, tile_v):
    """Pick (tile_n, tile_v): sublane/lane aligned, sized to the VMEM budget."""
    sub = 8 if itemsize >= 4 else (16 if itemsize == 2 else 32)
    min_rows = 256                             # good DMA amortization
    if tile_v is not None:
        tv = int(tile_v)
        if tv != v:
            tv = max(128, _round_down(tv, 128))
    elif v * itemsize * min_rows <= block_budget:
        tv = v                                 # full rows fit comfortably
    else:
        tv = _round_down(block_budget // (min_rows * itemsize), 128)
        tv = max(128, min(tv, _round_up(v, 128)))
        if tv >= v:
            tv = v
    if tile_n is not None:
        tn = max(sub, _round_down(int(tile_n), sub))
    else:
        tn = block_budget // max(1, tv * itemsize)
        tn = min(tn, 1024, _round_up(n, sub))
        tn = max(sub, _round_down(tn, sub))
    return tn, tv


def label_smoothing_loss(x, target, *, size, padding_idx, smoothing,
                         tile_n=None, tile_v=None):
    """x: (N, size) log-probabilities, target: (N,) int.  Returns the scalar
    KLDivLoss(size_average=False) against the label-smoothed distribution."""
    assert x.ndim == 2 and x.shape[1] == size
    assert size > 2, "label smoothing needs size > 2 (fill = smoothing/(size-2))"
    n, v = x.shape
    confidence = 1.0 - smoothing
    fill = smoothing / (size - 2)

    # Per-row entropy term sum_j y*log(y) of the smoothed distribution
    # (compile-time constant, 0*log(0) := 0) -> no transcendentals in-kernel.
    row_const = 0.0
    if confidence > 0.0:
        row_const += confidence * math.log(confidence)
    if fill > 0.0:
        row_const += (size - 2) * fill * math.log(fill)

    itemsize = jnp.dtype(x.dtype).itemsize
    vmem_cap = _vmem_capacity_bytes()
    block_budget = min(16 * 1024 * 1024, vmem_cap // 8)   # double-buffered input
    vmem_limit = int(min(vmem_cap * 3 // 4, 100 * 1024 * 1024))

    tn, tv = _choose_tiles(n, v, itemsize, block_budget, tile_n, tile_v)
    grid_r = pl.cdiv(n, tn)
    grid_v = pl.cdiv(v, tv)

    tgt2 = target.reshape(n, 1).astype(jnp.int32)

    kernel = functools.partial(
        _label_smoothing_kernel,
        padding_idx=padding_idx, fill=fill, confidence=confidence,
        n_rows=n, n_cols=v, tile_n=tn, tile_v=tv,
        mask_rows=(n % tn) != 0, mask_cols=(v % tv) != 0)

    partials = pl.pallas_call(
        kernel,
        out_shape=jax.ShapeDtypeStruct((grid_r, 8, 128), jnp.float32),
        grid=(grid_r, grid_v),
        in_specs=[
            pl.BlockSpec((tn, tv), lambda i, j: (i, j)),   # streamed x tiles
            pl.BlockSpec((tn, 1), lambda i, j: (i, 0)),    # matching target tile
        ],
        # One lane-dense partial block per row tile, resident across the V axis.
        out_specs=pl.BlockSpec((1, 8, 128), lambda i, j: (i, 0, 0)),
        compiler_params=pltpu.CompilerParams(
            dimension_semantics=("parallel", "arbitrary"),
            vmem_limit_bytes=vmem_limit),
    )(x, tgt2)

    # Tiny epilogue in XLA: combine per-row-tile cross partials with the
    # constant entropy term over valid (non-padding-target) rows.
    # TODO(synk): the module also stashes the full smoothed distribution in
    # self.true_dist as a side effect; only the scalar loss is produced here.
    cross = jnp.sum(partials[:, 0, 0])
    n_valid = jnp.sum((target != padding_idx).astype(jnp.float32))
    return jnp.float32(row_const) * n_valid - cross


def _reference_loss(x, target, *, size, padding_idx, smoothing):
    """Pure-JAX reference matching the PyTorch module semantics."""
    confidence = 1.0 - smoothing
    n, v = x.shape
    col = jnp.arange(v)[None, :]
    tgt = target[:, None]
    td = jnp.where(col == tgt, confidence, smoothing / (size - 2))
    td = jnp.where(col == padding_idx, 0.0, td)
    td = jnp.where(tgt == padding_idx, 0.0, td)
    safe = jnp.where(td > 0, td, 1.0)
    return jnp.sum(jnp.where(td > 0, td * (jnp.log(safe) - x), 0.0))


if __name__ == "__main__":
    PADDING_IDX = 0
    SMOOTHING = 0.1

    # Case 1: single tile (N=8 tokens, vocab=32).
    SIZE, N = 32, 8
    kx, kt = jax.random.split(jax.random.PRNGKey(0))
    x = jax.nn.log_softmax(jax.random.normal(kx, (N, SIZE), jnp.float32), -1)
    target = jax.random.randint(kt, (N,), 0, SIZE, dtype=jnp.int32)
    target = target.at[3].set(PADDING_IDX)             # exercise row-zeroing path
    loss = label_smoothing_loss(x, target, size=SIZE, padding_idx=PADDING_IDX,
                                smoothing=SMOOTHING)
    loss = jax.block_until_ready(loss)
    ref = _reference_loss(x, target, size=SIZE, padding_idx=PADDING_IDX,
                          smoothing=SMOOTHING)
    assert jnp.allclose(loss, ref, rtol=1e-4, atol=1e-4), (loss, ref)

    # Case 2: multi row-tile + ragged rows (40 % 16 != 0) without padding x.
    N2, SIZE2 = 40, 128
    k1, k2 = jax.random.split(jax.random.PRNGKey(1))
    x2 = jax.nn.log_softmax(jax.random.normal(k1, (N2, SIZE2), jnp.float32), -1)
    t2 = jax.random.randint(k2, (N2,), 0, SIZE2, dtype=jnp.int32)
    t2 = t2.at[0].set(PADDING_IDX)
    loss2 = label_smoothing_loss(x2, t2, size=SIZE2, padding_idx=PADDING_IDX,
                                 smoothing=SMOOTHING, tile_n=16, tile_v=128)
    loss2 = jax.block_until_ready(loss2)
    ref2 = _reference_loss(x2, t2, size=SIZE2, padding_idx=PADDING_IDX,
                           smoothing=SMOOTHING)
    assert jnp.allclose(loss2, ref2, rtol=1e-4, atol=1e-4), (loss2, ref2)

    # Case 3: full 2-D grid — ragged rows AND ragged vocab tiles (V-axis tiling).
    N3, SIZE3 = 24, 160
    k3, k4 = jax.random.split(jax.random.PRNGKey(2))
    x3 = jax.nn.log_softmax(jax.random.normal(k3, (N3, SIZE3), jnp.float32), -1)
    t3 = jax.random.randint(k4, (N3,), 0, SIZE3, dtype=jnp.int32)
    t3 = t3.at[5].set(PADDING_IDX)
    loss3 = label_smoothing_loss(x3, t3, size=SIZE3, padding_idx=PADDING_IDX,
                                 smoothing=SMOOTHING, tile_n=16, tile_v=128)
    loss3 = jax.block_until_ready(loss3)
    ref3 = _reference_loss(x3, t3, size=SIZE3, padding_idx=PADDING_IDX,
                           smoothing=SMOOTHING)
    assert jnp.allclose(loss3, ref3, rtol=1e-4, atol=1e-4), (loss3, ref3)

    print("KERNEL_OK")
</pallas_src>

<mosaic_0001>
module attributes {stable_mosaic.version = 11 : i64} {
  func.func @_label_smoothing_kernel(%arg0: i32, %arg1: i32, %arg2: memref<8x32xf32, #tpu.memory_space<vmem>>, %arg3: memref<8x1xi32, #tpu.memory_space<vmem>>, %arg4: memref<1x8x128xf32, #tpu.memory_space<vmem>>) attributes {dimension_semantics = [#tpu.dimension_semantics<parallel>, #tpu.dimension_semantics<arbitrary>], iteration_bounds = array<i64: 1, 1>, scalar_prefetch = 0 : i64, scratch_operands = 0 : i64, tpu.core_type = #tpu.core_type<tc>, window_params = [{transform_indices = @transform_0, window_bounds = array<i64: 8, 32>}, {transform_indices = @transform_1, window_bounds = array<i64: 8, 1>}, {transform_indices = @transform_2, window_bounds = array<i64: 1, 8, 128>}]} {
    %c0_i32 = arith.constant 0 : i32
    %0 = arith.cmpi eq, %arg1, %c0_i32 : i32
    %1 = arith.extui %0 : i1 to i32
    %c0_i32_0 = arith.constant 0 : i32
    %2 = arith.cmpi ne, %1, %c0_i32_0 : i32
    scf.if %2 {
      %cst_15 = arith.constant 0.000000e+00 : f32
      %33 = vector.broadcast %cst_15 : f32 to vector<1x8x128xf32>
      %c0_16 = arith.constant 0 : index
      %c0_17 = arith.constant 0 : index
      %c0_18 = arith.constant 0 : index
      %34 = vector.load %arg4[%c0_16, %c0_17, %c0_18] : memref<1x8x128xf32, #tpu.memory_space<vmem>>, vector<1x8x128xf32>
      tpu.vector_store %arg4[%c0_16, %c0_17, %c0_18], %33 {strides = array<i32>} : memref<1x8x128xf32, #tpu.memory_space<vmem>>, vector<1x8x128xf32>,
    } else {
    }
    %c0 = arith.constant 0 : index
    %c0_1 = arith.constant 0 : index
    %3 = vector.load %arg2[%c0, %c0_1] : memref<8x32xf32, #tpu.memory_space<vmem>>, vector<8x32xf32>
    %c0_2 = arith.constant 0 : index
    %c0_3 = arith.constant 0 : index
    %4 = vector.load %arg3[%c0_2, %c0_3] : memref<8x1xi32, #tpu.memory_space<vmem>>, vector<8x1xi32>
    %c32_i32 = arith.constant 32 : i32
    %5 = arith.muli %arg1, %c32_i32 : i32
    %6 = tpu.iota {dimensions = array<i32: 1>} : vector<1x32xi32>
    %7 = vector.broadcast %5 : i32 to vector<1x32xi32>
    %8 = arith.addi %7, %6 : vector<1x32xi32>
    %c0_i32_4 = arith.constant 0 : i32
    %9 = vector.broadcast %c0_i32_4 : i32 to vector<8x1xi32>
    %10 = arith.cmpi ne, %4, %9 : vector<8x1xi32>
    %c0_i32_5 = arith.constant 0 : i32
    %11 = vector.broadcast %c0_i32_5 : i32 to vector<1x32xi32>
    %12 = arith.cmpi ne, %8, %11 : vector<1x32xi32>
    %13 = vector.broadcast %10 : vector<8x1xi1> to vector<8x32xi1>
    %14 = vector.broadcast %12 : vector<1x32xi1> to vector<8x32xi1>
    %15 = arith.andi %13, %14 : vector<8x32xi1>
    %16 = vector.broadcast %8 : vector<1x32xi32> to vector<8x32xi32>
    %17 = vector.broadcast %4 : vector<8x1xi32> to vector<8x32xi32>
    %18 = arith.cmpi eq, %16, %17 : vector<8x32xi32>
    %cst = arith.constant 0.899999976 : f32
    %cst_6 = arith.constant 0.00333333341 : f32
    %19 = vector.broadcast %cst : f32 to vector<8x32xf32>
    %20 = vector.broadcast %cst_6 : f32 to vector<8x32xf32>
    %21 = arith.select %18, %19, %20 : vector<8x32xi1>, vector<8x32xf32>
    %22 = arith.mulf %21, %3 : vector<8x32xf32>
    %cst_7 = arith.constant 0.000000e+00 : f32
    %23 = vector.broadcast %cst_7 : f32 to vector<8x32xf32>
    %24 = arith.select %15, %22, %23 : vector<8x32xi1>, vector<8x32xf32>
    %c0_8 = arith.constant 0 : index
    %c0_9 = arith.constant 0 : index
    %c0_10 = arith.constant 0 : index
    %25 = vector.load %arg4[%c0_8, %c0_9, %c0_10] : memref<1x8x128xf32, #tpu.memory_space<vmem>>, vector<1x8x128xf32>
    %26 = vector.shape_cast %24 : vector<8x32xf32> to vector<1x8x32xf32>
    %cst_11 = arith.constant dense<0.000000e+00> : vector<1xf32>
    %27 = vector.multi_reduction <add>, %26, %cst_11 [1, 2] : vector<1x8x32xf32> to vector<1xf32>
    %28 = vector.shape_cast %27 : vector<1xf32> to vector<1x1x1xf32>
    %29 = vector.extract %28[0, 0, 0] : f32 from vector<1x1x1xf32>
    %30 = vector.broadcast %29 : f32 to vector<1x8x128xf32>
    %31 = arith.addf %25, %30 : vector<1x8x128xf32>
    %c0_12 = arith.constant 0 : index
    %c0_13 = arith.constant 0 : index
    %c0_14 = arith.constant 0 : index
    %32 = vector.load %arg4[%c0_12, %c0_13, %c0_14] : memref<1x8x128xf32, #tpu.memory_space<vmem>>, vector<1x8x128xf32>
    tpu.vector_store %arg4[%c0_12, %c0_13, %c0_14], %31 {strides = array<i32>} : memref<1x8x128xf32, #tpu.memory_space<vmem>>, vector<1x8x128xf32>,
    return
  }
  func.func @transform_0(%arg0: i32, %arg1: i32) -> (i32, i32) {
    %c0_i32 = arith.constant 0 : i32
    return %arg0, %arg1 : i32, i32
  }
  func.func @transform_1(%arg0: i32, %arg1: i32) -> (i32, i32) {
    %c0_i32 = arith.constant 0 : i32
    %c0_i32_0 = arith.constant 0 : i32
    return %arg0, %c0_i32 : i32, i32
  }
  func.func @transform_2(%arg0: i32, %arg1: i32) -> (i32, i32, i32) {
    %c0_i32 = arith.constant 0 : i32
    %c0_i32_0 = arith.constant 0 : i32
    %c0_i32_1 = arith.constant 0 : i32
    return %arg0, %c0_i32, %c0_i32_0 : i32, i32, i32
  }
}

</mosaic_0001>

<llo_original>
// kernel: tpu_custom_call.1
$region0: #{tpu_custom_call.1}
  #allocation0 [shape = 'u32[]', space=smem, size = 0x4, offset = 0x4, fixed_abs, tag = 'smem constant byte address 0x4 - core index']
  #allocation1 [shape = 'u32[72,128]{1,0:T(1,128)}', space=vmem, size = 0x9000, scoped, tag = 'internal scratch']
  %s0 = inlined_call_operand.vmem [shape: f32[8,32], index: 0, kind: input, shape index: {}]
  %s1 = inlined_call_operand.vmem [shape: s32[8,1], index: 1, kind: input, shape index: {}]
  %s2 = inlined_call_operand.hbm [shape: f32[1,8,128], index: 2, kind: output, shape index: {}]
  %s3 = sld [smem:[#allocation0]]
  $region22: #{tpu_custom_call.1} parent=0
    _
  %s5 = ssub.s32 1, %s3
  %s6 = scalar_select 0, %s5, %s3
  $region1: #{tpu_custom_call.1} parent=0
    #allocation2 [shape = 'u8[4096]{0}', space=vmem, size = 0x1000, scoped, tag = 'output window, operand 0, single buffered']
    #allocation3 [shape = 's32[1]{0}', space=sflag, size = 0x4, scoped, tag = 'scoped memory for tpu_custom_call.1']
    %7 = vsyncpa [#allocation3], 0
    // Predicated region
    $region2: #{tpu_custom_call.1} parent=1 // pred_check
      _
    $region3: #{tpu_custom_call.1} parent=1 // pred_check_branch
      %9 = sbr.rel (0) target = $region5
    $region4: #{tpu_custom_call.1} parent=1 // pred_region
      _
    $region5: #{tpu_custom_call.1} parent=1 // pred_fallthru
      _
    // Predicated region
    $region6: #{tpu_custom_call.1} parent=1 // pred_check
      _
    $region7: #{tpu_custom_call.1} parent=1 // pred_check_branch
      %11 = sbr.rel (0) target = $region9
    $region8: #{tpu_custom_call.1} parent=1 // pred_region
      _
    $region9: #{tpu_custom_call.1} parent=1 // pred_fallthru
      _
    %p12 = scmp.eq.s32.totalorder 0, 0
    // Predicated region
    $region10: #{tpu_custom_call.1} parent=1 // pred_check
      %p13 = pneg %p12
    $region11: #{tpu_custom_call.1} parent=1 // pred_check_branch
      %15 = sbr.rel (%p13) target = $region13
    $region12: #{tpu_custom_call.1} parent=1 // pred_region
      %16 = vst [vmem:[#allocation2] sm:$0xff] 0.0
    $region13: #{tpu_custom_call.1} parent=1 // pred_fallthru
      _
    %v17 = vld [vmem:[%s0] sm:$0xff]
    %v18 = vld [vmem:[%s1] sm:$0xff]
    %s19 = smul.u32 0, 32
    %v20 = vlaneseq
    %v21 = vand.u32 %v20, 127
    %v22 = vstv %s19
    %v23 = vadd.s32 %v22, %v21
    %vm24 = vcmp.ne.s32.totalorder %v18, 0
    %vm25 = vcmp.ne.s32.totalorder %v23, 0
    %v26 = vsel %vm24, 1, 0
    %27 = vset.pattern.permute.xlu0 0
    %28 = vperm.xlu0 %27, %v26
    %v29 = vpop.permute.xlu0 %28
    %vm30 = vcmp.eq.s32.totalorder %v29, 1
    %v31 = vsel %vm25, 1, 0
    %vm32 = vcmp.eq.s32.totalorder %v31, 1
    %vm33 = vmand %vm30, %vm32
    %34 = vset.pattern.permute.xlu0 0
    %35 = vperm.xlu0 %34, %v18
    %v36 = vpop.permute.xlu0 %35
    %vm37 = vcmp.eq.s32.totalorder %v23, %v36
    %v38 = vsel %vm37, 0.9, 0.0033333334
    %v39 = vmul.f32 %v38, %v17
    %v40 = vsel %vm33, %v39, 0.0
    %v41 = vld [vmem:[#allocation2] sm:$0xff]
    %vm42 = vcmask 261120
    %v43 = vsel %vm42, %v40, 0.0
    %44 = vadd.xlane.f32.xlu0 %v43
    %v45 = vpop.xlane.xlu0 %44
    %v46 = vrot.slane %v45, 4
    %v47 = vadd.f32 %v45, %v46
    %v48 = vrot.slane %v47, 2
    %v49 = vadd.f32 %v47, %v48
    %v50 = vrot.slane %v49, 1
    %v51 = vadd.f32 %v49, %v50
    %s52 = vtos %v51
    %v53 = vstv %s52
    %v54 = vadd.f32 %v41, %v53
    %55 = vst [vmem:[#allocation2] sm:$0xff] %v54
    // Predicated region
    $region14: #{tpu_custom_call.1} parent=1 // pred_check
      _
    $region15: #{tpu_custom_call.1} parent=1 // pred_check_branch
      %57 = sbr.rel (0) target = $region17
    $region16: #{tpu_custom_call.1} parent=1 // pred_region
      %59 = vsyncadd [#allocation3], 0
      %s61 = sshll.u32 [#allocation2], 4
      %s62 = int_to_ptr.vmem [resolvable:$true] %s61
      %s63 = sshll.u32 %s2, 4
      %s64 = int_to_ptr.hbm [resolvable:$true] %s63
      %66 = dma.vmem_to_hbm [thread:$0]  %s62, 128, %s64, [#allocation3]
    $region17: #{tpu_custom_call.1} parent=1 // pred_fallthru
      _
    // Predicated region
    $region18: #{tpu_custom_call.1} parent=1 // pred_check
      _
    $region19: #{tpu_custom_call.1} parent=1 // pred_check_branch
      %68 = sbr.rel (0) target = $region21
    $region20: #{tpu_custom_call.1} parent=1 // pred_region
      %70 = dma.done [#allocation3], 128
    $region21: #{tpu_custom_call.1} parent=1 // pred_fallthru
      _
    %71 = vsyncpa [#allocation3], 1

</llo_original>
